<compile_context>
chip_gen: v5e
topology: v5e:2x2
jax: 0.10.0
libtpu: 0.0.40
codegen_flags: <defaults>
</compile_context>

<pallas_src>
import functools

import jax
import jax.numpy as jnp
from jax.experimental import pallas as pl
from jax.experimental.pallas import tpu as pltpu

LANE = 128          # TPU lane width: hidden dim padded to this
STATE_SIZE = 4
HIDDEN = 64
ACTION_SIZE = 2


def qnetwork_kernel(x_ref, w1_ref, b1_ref, w2_ref, b2_ref, w3_ref, b3_ref, o_ref):
    """Fused MLP on one batch tile: relu(x@W1+b1) -> relu(.@W2+b2) -> .@W3+b3."""
    # x arrives as f32 straight from HBM; cast to bf16 for the MXU inside the
    # kernel (fuses what used to be a separate XLA cast pass over x).
    x = x_ref[...].astype(w1_ref.dtype)

    # Layers 1-2: bf16 operands into the MXU, f32 accumulation + f32 bias/ReLU.
    h1 = jnp.dot(x, w1_ref[...], preferred_element_type=jnp.float32) + b1_ref[...]
    h1 = jnp.maximum(h1, 0.0).astype(w2_ref.dtype)

    h2 = jnp.dot(h1, w2_ref[...], preferred_element_type=jnp.float32) + b2_ref[...]
    h2 = jnp.maximum(h2, 0.0)  # stays f32: final layer uses f32 operands

    out = jnp.dot(h2, w3_ref[...], preferred_element_type=jnp.float32) + b3_ref[...]
    o_ref[...] = out.astype(o_ref.dtype)  # narrow (TB, action_size) store


def _pad_to(a, shape):
    pads = [(0, t - s) for s, t in zip(a.shape, shape)]
    return jnp.pad(a, pads)


def pack_params(params, compute_dtype=jnp.bfloat16):
    """Zero-pad hidden dims to 128 lanes; bf16 weights for layers 1-2, f32 layer 3.

    Padded hidden units get zero weights and zero bias, so they are exactly 0
    after ReLU and contribute nothing downstream. The action dim is NOT padded:
    the kernel emits a narrow (B, action_size) output directly.
    """
    w1 = _pad_to(params["w1"], (params["w1"].shape[0], LANE)).astype(compute_dtype)
    w2 = _pad_to(params["w2"], (LANE, LANE)).astype(compute_dtype)
    w3 = _pad_to(params["w3"], (LANE, params["w3"].shape[1])).astype(jnp.float32)
    b1 = _pad_to(params["b1"], (1, LANE)).astype(jnp.float32)
    b2 = _pad_to(params["b2"], (1, LANE)).astype(jnp.float32)
    b3 = params["b3"].astype(jnp.float32)
    return {"w1": w1, "b1": b1, "w2": w2, "b2": b2, "w3": w3, "b3": b3}


@functools.partial(jax.jit, static_argnames=("block_b",))
def qnetwork_forward(x, packed, *, block_b=None):
    """x: (B, state_size) f32. packed: pack_params() output. Returns (B, action_size) f32."""
    w1, b1 = packed["w1"], packed["b1"]
    w2, b2 = packed["w2"], packed["b2"]
    w3, b3 = packed["w3"], packed["b3"]
    B, S = x.shape
    A = w3.shape[1]

    # Tile selection (review): single grid step for RL-sized batches (no per-step
    # overhead, no batch padding); 1024-row tiles for large streaming batches
    # (~85%+ of HBM roofline, >= 2 tiles keeps both v7x TensorCores busy).
    if block_b is None:
        block_b = B if B <= 1024 else 1024
    num_tiles = pl.cdiv(B, block_b)
    Bp = num_tiles * block_b
    x_p = x if Bp == B else jnp.pad(x, ((0, Bp - B), (0, 0)))

    # Weights/biases: constant index_map -> stay resident in VMEM across the grid.
    const = lambda a: pl.BlockSpec(a.shape, lambda i: (0,) * a.ndim)

    flops = 2 * Bp * (S * LANE + LANE * LANE + LANE * A)
    bytes_accessed = (
        x_p.size * x_p.dtype.itemsize
        + sum(a.size * a.dtype.itemsize for a in (w1, b1, w2, b2, w3, b3))
        + Bp * A * 4  # narrow f32 output writeback
    )

    out = pl.pallas_call(
        qnetwork_kernel,
        out_shape=jax.ShapeDtypeStruct((Bp, A), jnp.float32),
        grid=(num_tiles,),
        in_specs=[
            pl.BlockSpec((block_b, S), lambda i: (i, 0)),  # x tile streams over batch
            const(w1), const(b1), const(w2), const(b2), const(w3), const(b3),
        ],
        out_specs=pl.BlockSpec((block_b, A), lambda i: (i, 0)),
        compiler_params=pltpu.CompilerParams(
            dimension_semantics=("parallel",),  # megacore-shardable on v7x
        ),
        cost_estimate=pl.CostEstimate(
            flops=flops, transcendentals=0, bytes_accessed=bytes_accessed
        ),
    )(x_p, w1, b1, w2, b2, w3, b3)

    return out if Bp == B else out[:B]


def init_params(key, state_size, hidden, action_size):
    """Deterministic init mimicking nn.Linear's U(-1/sqrt(fan_in), 1/sqrt(fan_in))."""
    ks = jax.random.split(key, 6)

    def linear(kw, kb, fan_in, fan_out):
        bound = 1.0 / jnp.sqrt(jnp.float32(fan_in))
        # stored as (in, out) == transpose of PyTorch's (out, in)
        w = jax.random.uniform(kw, (fan_in, fan_out), jnp.float32, -bound, bound)
        b = jax.random.uniform(kb, (1, fan_out), jnp.float32, -bound, bound)
        return w, b

    w1, b1 = linear(ks[0], ks[1], state_size, hidden)
    w2, b2 = linear(ks[2], ks[3], hidden, hidden)
    w3, b3 = linear(ks[4], ks[5], hidden, action_size)
    return {"w1": w1, "b1": b1, "w2": w2, "b2": b2, "w3": w3, "b3": b3}


def reference_forward_f32(x, p):
    """Full-f32 math of the original PyTorch module."""
    h1 = jnp.maximum(jnp.dot(x, p["w1"]) + p["b1"], 0.0)
    h2 = jnp.maximum(jnp.dot(h1, p["w2"]) + p["b2"], 0.0)
    return jnp.dot(h2, p["w3"]) + p["b3"]


def reference_forward_mixed(x, p):
    """Matches the kernel's dtype path: bf16 MXU operands for layers 1-2 with
    f32 accumulation, full f32 for layer 3."""
    bf = jnp.bfloat16
    h1 = jnp.dot(x.astype(bf), p["w1"].astype(bf),
                 preferred_element_type=jnp.float32) + p["b1"]
    h1 = jnp.maximum(h1, 0.0)
    h2 = jnp.dot(h1.astype(bf), p["w2"].astype(bf),
                 preferred_element_type=jnp.float32) + p["b2"]
    h2 = jnp.maximum(h2, 0.0)
    return jnp.dot(h2, p["w3"], preferred_element_type=jnp.float32) + p["b3"]


if __name__ == "__main__":
    # CartPole: state_size=4, action_size=2, hidden=64 per the module.
    # Small RL-style batch -> single grid step, no batch padding, no wrapper slice.
    state_size, hidden, action_size = STATE_SIZE, HIDDEN, ACTION_SIZE
    batch = 64

    key = jax.random.PRNGKey(0)
    kx, kp = jax.random.split(key)
    x = jax.random.normal(kx, (batch, state_size), jnp.float32)
    params = init_params(kp, state_size, hidden, action_size)
    packed = pack_params(params)

    out = qnetwork_forward(x, packed)
    out = jax.block_until_ready(out)
    assert out.shape == (batch, action_size)

    # Tight check vs a reference using the same mixed-precision path as the kernel.
    ref_mixed = reference_forward_mixed(x, params)
    assert jnp.allclose(out, ref_mixed, atol=1e-3, rtol=1e-3), "mismatch vs mixed ref"

    # Loose sanity check vs the full-f32 math of the original PyTorch module.
    ref_f32 = reference_forward_f32(x, params)
    assert jnp.allclose(out, ref_f32, atol=5e-2, rtol=5e-2), "mismatch vs f32 ref"

    # Also exercise the tiled + batch-padded path (grid of 3 tiles of 24 rows,
    # Bp=72 > 64) and confirm it matches the single-tile result.
    out_tiled = jax.block_until_ready(qnetwork_forward(x, packed, block_b=24))
    assert out_tiled.shape == (batch, action_size)
    assert jnp.allclose(out_tiled, out, atol=1e-5, rtol=1e-5), "tiled path mismatch"

    print("KERNEL_OK")
</pallas_src>

<mosaic_0001>
module attributes {stable_mosaic.version = 11 : i64} {
  func.func @qnetwork_kernel(%arg0: i32, %arg1: memref<64x4xf32, #tpu.memory_space<vmem>>, %arg2: memref<4x128xbf16, #tpu.memory_space<vmem>>, %arg3: memref<1x128xf32, #tpu.memory_space<vmem>>, %arg4: memref<128x128xbf16, #tpu.memory_space<vmem>>, %arg5: memref<1x128xf32, #tpu.memory_space<vmem>>, %arg6: memref<128x2xf32, #tpu.memory_space<vmem>>, %arg7: memref<1x2xf32, #tpu.memory_space<vmem>>, %arg8: memref<64x2xf32, #tpu.memory_space<vmem>>) attributes {dimension_semantics = [#tpu.dimension_semantics<parallel>], iteration_bounds = array<i64: 1>, scalar_prefetch = 0 : i64, scratch_operands = 0 : i64, tpu.core_type = #tpu.core_type<tc>, window_params = [{transform_indices = @transform_0, window_bounds = array<i64: 64, 4>}, {pipeline_mode = #tpu.pipeline_mode<synchronous>, transform_indices = @transform_1, window_bounds = array<i64: 4, 128>}, {pipeline_mode = #tpu.pipeline_mode<synchronous>, transform_indices = @transform_2, window_bounds = array<i64: 1, 128>}, {pipeline_mode = #tpu.pipeline_mode<synchronous>, transform_indices = @transform_3, window_bounds = array<i64: 128, 128>}, {pipeline_mode = #tpu.pipeline_mode<synchronous>, transform_indices = @transform_4, window_bounds = array<i64: 1, 128>}, {pipeline_mode = #tpu.pipeline_mode<synchronous>, transform_indices = @transform_5, window_bounds = array<i64: 128, 2>}, {pipeline_mode = #tpu.pipeline_mode<synchronous>, transform_indices = @transform_6, window_bounds = array<i64: 1, 2>}, {transform_indices = @transform_7, window_bounds = array<i64: 64, 2>}]} {
    %c0 = arith.constant 0 : index
    %c0_0 = arith.constant 0 : index
    %0 = vector.load %arg1[%c0, %c0_0] : memref<64x4xf32, #tpu.memory_space<vmem>>, vector<64x4xf32>
    %1 = arith.truncf %0 : vector<64x4xf32> to vector<64x4xbf16>
    %c0_1 = arith.constant 0 : index
    %c0_2 = arith.constant 0 : index
    %2 = vector.load %arg2[%c0_1, %c0_2] : memref<4x128xbf16, #tpu.memory_space<vmem>>, vector<4x128xbf16>
    %cst = arith.constant dense<0.000000e+00> : vector<64x128xf32>
    %3 = tpu.matmul %1, %2, %cst {dimension_numbers = #tpu.dot_dimension_numbers<[1], [0], [0], [1], [0, 0, 1, 1], [], []>} : vector<64x4xbf16>, vector<4x128xbf16>, vector<64x128xf32> -> vector<64x128xf32>
    %c0_3 = arith.constant 0 : index
    %c0_4 = arith.constant 0 : index
    %4 = vector.load %arg3[%c0_3, %c0_4] : memref<1x128xf32, #tpu.memory_space<vmem>>, vector<1x128xf32>
    %5 = vector.broadcast %4 : vector<1x128xf32> to vector<64x128xf32>
    %6 = arith.addf %3, %5 : vector<64x128xf32>
    %cst_5 = arith.constant 0.000000e+00 : f32
    %7 = vector.broadcast %cst_5 : f32 to vector<64x128xf32>
    %8 = arith.maximumf %6, %7 : vector<64x128xf32>
    %9 = arith.truncf %8 : vector<64x128xf32> to vector<64x128xbf16>
    %c0_6 = arith.constant 0 : index
    %c0_7 = arith.constant 0 : index
    %10 = vector.load %arg4[%c0_6, %c0_7] : memref<128x128xbf16, #tpu.memory_space<vmem>>, vector<128x128xbf16>
    %cst_8 = arith.constant dense<0.000000e+00> : vector<64x128xf32>
    %11 = tpu.matmul %9, %10, %cst_8 {dimension_numbers = #tpu.dot_dimension_numbers<[1], [0], [0], [1], [0, 0, 1, 1], [], []>} : vector<64x128xbf16>, vector<128x128xbf16>, vector<64x128xf32> -> vector<64x128xf32>
    %c0_9 = arith.constant 0 : index
    %c0_10 = arith.constant 0 : index
    %12 = vector.load %arg5[%c0_9, %c0_10] : memref<1x128xf32, #tpu.memory_space<vmem>>, vector<1x128xf32>
    %13 = vector.broadcast %12 : vector<1x128xf32> to vector<64x128xf32>
    %14 = arith.addf %11, %13 : vector<64x128xf32>
    %cst_11 = arith.constant 0.000000e+00 : f32
    %15 = vector.broadcast %cst_11 : f32 to vector<64x128xf32>
    %16 = arith.maximumf %14, %15 : vector<64x128xf32>
    %c0_12 = arith.constant 0 : index
    %c0_13 = arith.constant 0 : index
    %17 = vector.load %arg6[%c0_12, %c0_13] : memref<128x2xf32, #tpu.memory_space<vmem>>, vector<128x2xf32>
    %cst_14 = arith.constant dense<0.000000e+00> : vector<64x2xf32>
    %18 = tpu.matmul %16, %17, %cst_14 {dimension_numbers = #tpu.dot_dimension_numbers<[1], [0], [0], [1], [0, 0, 1, 1], [], []>} : vector<64x128xf32>, vector<128x2xf32>, vector<64x2xf32> -> vector<64x2xf32>
    %c0_15 = arith.constant 0 : index
    %c0_16 = arith.constant 0 : index
    %19 = vector.load %arg7[%c0_15, %c0_16] : memref<1x2xf32, #tpu.memory_space<vmem>>, vector<1x2xf32>
    %20 = vector.broadcast %19 : vector<1x2xf32> to vector<64x2xf32>
    %21 = arith.addf %18, %20 : vector<64x2xf32>
    %c0_17 = arith.constant 0 : index
    %c0_18 = arith.constant 0 : index
    %22 = vector.load %arg8[%c0_17, %c0_18] : memref<64x2xf32, #tpu.memory_space<vmem>>, vector<64x2xf32>
    tpu.vector_store %arg8[%c0_17, %c0_18], %21 {strides = array<i32>} : memref<64x2xf32, #tpu.memory_space<vmem>>, vector<64x2xf32>,
    return
  }
  func.func @transform_0(%arg0: i32) -> (i32, i32) {
    %c0_i32 = arith.constant 0 : i32
    %c0_i32_0 = arith.constant 0 : i32
    return %arg0, %c0_i32 : i32, i32
  }
  func.func @transform_1(%arg0: i32) -> (i32, i32) {
    %c0_i32 = arith.constant 0 : i32
    %c0_i32_0 = arith.constant 0 : i32
    %c0_i32_1 = arith.constant 0 : i32
    return %c0_i32, %c0_i32_0 : i32, i32
  }
  func.func @transform_2(%arg0: i32) -> (i32, i32) {
    %c0_i32 = arith.constant 0 : i32
    %c0_i32_0 = arith.constant 0 : i32
    %c0_i32_1 = arith.constant 0 : i32
    return %c0_i32, %c0_i32_0 : i32, i32
  }
  func.func @transform_3(%arg0: i32) -> (i32, i32) {
    %c0_i32 = arith.constant 0 : i32
    %c0_i32_0 = arith.constant 0 : i32
    %c0_i32_1 = arith.constant 0 : i32
    return %c0_i32, %c0_i32_0 : i32, i32
  }
  func.func @transform_4(%arg0: i32) -> (i32, i32) {
    %c0_i32 = arith.constant 0 : i32
    %c0_i32_0 = arith.constant 0 : i32
    %c0_i32_1 = arith.constant 0 : i32
    return %c0_i32, %c0_i32_0 : i32, i32
  }
  func.func @transform_5(%arg0: i32) -> (i32, i32) {
    %c0_i32 = arith.constant 0 : i32
    %c0_i32_0 = arith.constant 0 : i32
    %c0_i32_1 = arith.constant 0 : i32
    return %c0_i32, %c0_i32_0 : i32, i32
  }
  func.func @transform_6(%arg0: i32) -> (i32, i32) {
    %c0_i32 = arith.constant 0 : i32
    %c0_i32_0 = arith.constant 0 : i32
    %c0_i32_1 = arith.constant 0 : i32
    return %c0_i32, %c0_i32_0 : i32, i32
  }
  func.func @transform_7(%arg0: i32) -> (i32, i32) {
    %c0_i32 = arith.constant 0 : i32
    %c0_i32_0 = arith.constant 0 : i32
    return %arg0, %c0_i32 : i32, i32
  }
}

</mosaic_0001>

<llo_original>
// kernel: qnetwork_forward.1
$region0: #{qnetwork_forward.1}
  #allocation0 [shape = 'u32[]', space=smem, size = 0x4, offset = 0x4, fixed_abs, tag = 'smem constant byte address 0x4 - core index']
  #allocation1 [shape = 'u32[72,128]{1,0:T(1,128)}', space=vmem, size = 0x9000, scoped, tag = 'internal scratch']
  %s0 = inlined_call_operand.vmem [shape: f32[64,4], index: 0, kind: input, shape index: {}]
  %s1 = inlined_call_operand.vmem [shape: bf16[4,128], index: 1, kind: input, shape index: {}]
  %s2 = inlined_call_operand.vmem [shape: f32[1,128], index: 2, kind: input, shape index: {}]
  %s3 = inlined_call_operand.vmem [shape: bf16[128,128], index: 3, kind: input, shape index: {}]
  %s4 = inlined_call_operand.vmem [shape: f32[1,128], index: 4, kind: input, shape index: {}]
  %s5 = inlined_call_operand.vmem [shape: f32[128,2], index: 5, kind: input, shape index: {}]
  %s6 = inlined_call_operand.vmem [shape: f32[1,2], index: 6, kind: input, shape index: {}]
  %s7 = inlined_call_operand.vmem [shape: f32[64,2], index: 7, kind: output, shape index: {}]
  %s8 = sld [smem:[#allocation0]]
  $region38: #{qnetwork_forward.1} parent=0
    _
  %s10 = ssub.s32 1, %s8
  %s11 = scalar_select 0, %s10, %s8
  // Predicated region
  $region2: #{qnetwork_forward.1} parent=0 // pred_check
    _
  $region3: #{qnetwork_forward.1} parent=0 // pred_check_branch
    %13 = sbr.rel (0) target = $region5
  $region4: #{qnetwork_forward.1} parent=0 // pred_region
    _
  $region5: #{qnetwork_forward.1} parent=0 // pred_fallthru
    _
  // Predicated region
  $region6: #{qnetwork_forward.1} parent=0 // pred_check
    _
  $region7: #{qnetwork_forward.1} parent=0 // pred_check_branch
    %15 = sbr.rel (0) target = $region9
  $region8: #{qnetwork_forward.1} parent=0 // pred_region
    _
  $region9: #{qnetwork_forward.1} parent=0 // pred_fallthru
    _
  // Predicated region
  $region10: #{qnetwork_forward.1} parent=0 // pred_check
    _
  $region11: #{qnetwork_forward.1} parent=0 // pred_check_branch
    %17 = sbr.rel (0) target = $region13
  $region12: #{qnetwork_forward.1} parent=0 // pred_region
    _
  $region13: #{qnetwork_forward.1} parent=0 // pred_fallthru
    _
  // Predicated region
  $region14: #{qnetwork_forward.1} parent=0 // pred_check
    _
  $region15: #{qnetwork_forward.1} parent=0 // pred_check_branch
    %19 = sbr.rel (0) target = $region17
  $region16: #{qnetwork_forward.1} parent=0 // pred_region
    _
  $region17: #{qnetwork_forward.1} parent=0 // pred_fallthru
    _
  // Predicated region
  $region18: #{qnetwork_forward.1} parent=0 // pred_check
    _
  $region19: #{qnetwork_forward.1} parent=0 // pred_check_branch
    %21 = sbr.rel (0) target = $region21
  $region20: #{qnetwork_forward.1} parent=0 // pred_region
    _
  $region21: #{qnetwork_forward.1} parent=0 // pred_fallthru
    _
  // Predicated region
  $region22: #{qnetwork_forward.1} parent=0 // pred_check
    _
  $region23: #{qnetwork_forward.1} parent=0 // pred_check_branch
    %23 = sbr.rel (0) target = $region25
  $region24: #{qnetwork_forward.1} parent=0 // pred_region
    _
  $region25: #{qnetwork_forward.1} parent=0 // pred_fallthru
    _
  // Predicated region
  $region26: #{qnetwork_forward.1} parent=0 // pred_check
    _
  $region27: #{qnetwork_forward.1} parent=0 // pred_check_branch
    %25 = sbr.rel (0) target = $region29
  $region28: #{qnetwork_forward.1} parent=0 // pred_region
    _
  $region29: #{qnetwork_forward.1} parent=0 // pred_fallthru
    _
  %v27 = vld [vmem:[%s0] sm:$0xff]
  %v28 = vld [vmem:[%s0 + $0x8] sm:$0xff]
  %v29 = vld [vmem:[%s0 + $0x10] sm:$0xff]
  %v30 = vld [vmem:[%s0 + $0x18] sm:$0xff]
  %v31 = vld [vmem:[%s0 + $0x20] sm:$0xff]
  %v32 = vld [vmem:[%s0 + $0x28] sm:$0xff]
  %v33 = vld [vmem:[%s0 + $0x30] sm:$0xff]
  %v34 = vld [vmem:[%s0 + $0x38] sm:$0xff]
  %v35 = vpack.c.bf16 %v28, %v27
  %v36 = vpack.c.bf16 %v30, %v29
  %v37 = vpack.c.bf16 %v32, %v31
  %v38 = vpack.c.bf16 %v34, %v33
  %v39 = vld [vmem:[%s1] sm:$0x3]
  %v40 = vld [vmem:[%s2] sm:$0x1]
  %v42 = vperm.slane %v40, 0
  %vm44 = vcmask 31744
  %v46 = vsel %vm44, %v35, 0
  %v49 = vsel %vm44, %v36, 0
  %v52 = vsel %vm44, %v37, 0
  %v55 = vsel %vm44, %v38, 0
  %vm57 = vcmask 1041408
  %v59 = vsel %vm57, %v39, 0
  %61 = vmatpush.bf16.msra.mxu0 0
  %62 = vmatpush.bf16.msra.mxu0 0
  %63 = vmatpush.bf16.msra.mxu0 0
  %64 = vmatpush.bf16.msra.mxu0 0
  %65 = vmatpush.bf16.msra.mxu0 0
  %66 = vmatpush.bf16.msra.mxu0 0
  %67 = vmatpush.bf16.msra.mxu0 0
  %68 = vmatpush.bf16.msra.mxu0 %v59
  %69 = vmatmul.bf16.gmra.mxu0 %v46
  %v70 = vpop.f32.mrf.mxu0
  %v71 = vadd.f32 %v42, %v70
  %v72 = vpop.f32.mrf.mxu0
  %v73 = vadd.f32 %v42, %v72
  %74 = vmatmul.bf16.gmra.mxu0 %v49
  %v75 = vpop.f32.mrf.mxu0
  %v76 = vadd.f32 %v42, %v75
  %v77 = vpop.f32.mrf.mxu0
  %v78 = vadd.f32 %v42, %v77
  %79 = vmatmul.bf16.gmra.mxu0 %v52
  %v80 = vpop.f32.mrf.mxu0
  %v81 = vadd.f32 %v42, %v80
  %v82 = vpop.f32.mrf.mxu0
  %v83 = vadd.f32 %v42, %v82
  %84 = vmatmul.bf16.gmra.mxu0 %v55
  %v85 = vpop.f32.mrf.mxu0
  %v86 = vadd.f32 %v42, %v85
  %v87 = vpop.f32.mrf.mxu0
  %v88 = vadd.f32 %v42, %v87
  %89 = vdwg.mxu0
  %v90 = vmax.f32 %v71, 0.0
  %v91 = vmax.f32 %v73, 0.0
  %v92 = vmax.f32 %v76, 0.0
  %v93 = vmax.f32 %v78, 0.0
  %v94 = vmax.f32 %v81, 0.0
  %v95 = vmax.f32 %v83, 0.0
  %v96 = vmax.f32 %v86, 0.0
  %v97 = vmax.f32 %v88, 0.0
  %v98 = vpack.c.bf16 %v91, %v90
  %v99 = vpack.c.bf16 %v93, %v92
  %v100 = vpack.c.bf16 %v95, %v94
  %v101 = vpack.c.bf16 %v97, %v96
  %v102 = vld [vmem:[%s3] sm:$0xf]
  %v103 = vld [vmem:[%s3 + $0x4] sm:$0xf]
  %v104 = vld [vmem:[%s3 + $0x8] sm:$0xf]
  %v105 = vld [vmem:[%s3 + $0xc] sm:$0xf]
  %v106 = vld [vmem:[%s3 + $0x10] sm:$0xf]
  %v107 = vld [vmem:[%s3 + $0x14] sm:$0xf]
  %v108 = vld [vmem:[%s3 + $0x18] sm:$0xf]
  %v109 = vld [vmem:[%s3 + $0x1c] sm:$0xf]
  %v110 = vld [vmem:[%s3 + $0x20] sm:$0xf]
  %v111 = vld [vmem:[%s3 + $0x24] sm:$0xf]
  %v112 = vld [vmem:[%s3 + $0x28] sm:$0xf]
  %v113 = vld [vmem:[%s3 + $0x2c] sm:$0xf]
  %v114 = vld [vmem:[%s3 + $0x30] sm:$0xf]
  %v115 = vld [vmem:[%s3 + $0x34] sm:$0xf]
  %v116 = vld [vmem:[%s3 + $0x38] sm:$0xf]
  %v117 = vld [vmem:[%s3 + $0x3c] sm:$0xf]
  %v118 = vld [vmem:[%s4] sm:$0x1]
  %v120 = vperm.slane %v118, 0
  %v138 = vunpack.c.l.b16 %v102
  %v139 = vunpack.c.l.b16 %v103
  %v140 = vunpack.c.l.b16 %v104
  %v141 = vunpack.c.l.b16 %v105
  %v142 = vunpack.c.l.b16 %v106
  %v143 = vunpack.c.l.b16 %v107
  %v144 = vunpack.c.l.b16 %v108
  %v145 = vunpack.c.l.b16 %v109
  %v146 = vunpack.c.l.b16 %v110
  %v147 = vunpack.c.l.b16 %v111
  %v148 = vunpack.c.l.b16 %v112
  %v149 = vunpack.c.l.b16 %v113
  %v150 = vunpack.c.l.b16 %v114
  %v151 = vunpack.c.l.b16 %v115
  %v152 = vunpack.c.l.b16 %v116
  %v153 = vunpack.c.l.b16 %v117
  %v154 = vpack.c.b16 %v139, %v138
  %v155 = vpack.c.b16 %v141, %v140
  %v156 = vpack.c.b16 %v143, %v142
  %v157 = vpack.c.b16 %v145, %v144
  %v158 = vpack.c.b16 %v147, %v146
  %v159 = vpack.c.b16 %v149, %v148
  %v160 = vpack.c.b16 %v151, %v150
  %v161 = vpack.c.b16 %v153, %v152
  %170 = vmatpush.bf16.msra.mxu0 %v161
  %171 = vmatpush.bf16.msra.mxu0 %v160
  %172 = vmatpush.bf16.msra.mxu0 %v159
  %173 = vmatpush.bf16.msra.mxu0 %v158
  %174 = vmatpush.bf16.msra.mxu0 %v157
  %175 = vmatpush.bf16.msra.mxu0 %v156
  %176 = vmatpush.bf16.msra.mxu0 %v155
  %177 = vmatpush.bf16.msra.mxu0 %v154
  %178 = vmatmul.bf16.gmra.mxu0 %v98
  %v179 = vpop.f32.mrf.mxu0
  %v180 = vadd.f32 %v120, %v179
  %v181 = vpop.f32.mrf.mxu0
  %v182 = vadd.f32 %v120, %v181
  %183 = vmatmul.bf16.gmra.mxu0 %v99
  %v184 = vpop.f32.mrf.mxu0
  %v185 = vadd.f32 %v120, %v184
  %v186 = vpop.f32.mrf.mxu0
  %v187 = vadd.f32 %v120, %v186
  %188 = vmatmul.bf16.gmra.mxu0 %v100
  %v189 = vpop.f32.mrf.mxu0
  %v190 = vadd.f32 %v120, %v189
  %v191 = vpop.f32.mrf.mxu0
  %v192 = vadd.f32 %v120, %v191
  %193 = vmatmul.bf16.gmra.mxu0 %v101
  %v194 = vpop.f32.mrf.mxu0
  %v195 = vadd.f32 %v120, %v194
  %v196 = vpop.f32.mrf.mxu0
  %v197 = vadd.f32 %v120, %v196
  %198 = vdwg.mxu0
  %v199 = vmax.f32 %v180, 0.0
  %v200 = vmax.f32 %v182, 0.0
  %v201 = vmax.f32 %v185, 0.0
  %v202 = vmax.f32 %v187, 0.0
  %v203 = vmax.f32 %v190, 0.0
  %v204 = vmax.f32 %v192, 0.0
  %v205 = vmax.f32 %v195, 0.0
  %v206 = vmax.f32 %v197, 0.0
  %v207 = vld [vmem:[%s5] sm:$0xff]
  %v208 = vld [vmem:[%s5 + $0x8] sm:$0xff]
  %v209 = vld [vmem:[%s5 + $0x10] sm:$0xff]
  %v210 = vld [vmem:[%s5 + $0x18] sm:$0xff]
  %v211 = vld [vmem:[%s5 + $0x20] sm:$0xff]
  %v212 = vld [vmem:[%s5 + $0x28] sm:$0xff]
  %v213 = vld [vmem:[%s5 + $0x30] sm:$0xff]
  %v214 = vld [vmem:[%s5 + $0x38] sm:$0xff]
  %v215 = vld [vmem:[%s5 + $0x40] sm:$0xff]
  %v216 = vld [vmem:[%s5 + $0x48] sm:$0xff]
  %v217 = vld [vmem:[%s5 + $0x50] sm:$0xff]
  %v218 = vld [vmem:[%s5 + $0x58] sm:$0xff]
  %v219 = vld [vmem:[%s5 + $0x60] sm:$0xff]
  %v220 = vld [vmem:[%s5 + $0x68] sm:$0xff]
  %v221 = vld [vmem:[%s5 + $0x70] sm:$0xff]
  %v222 = vld [vmem:[%s5 + $0x78] sm:$0xff]
  %v223 = vld [vmem:[%s6] sm:$0x1]
  %v225 = vperm.slane %v223, 0
  %227 = vmatpush.msra.mxu0 %v222
  %228 = vmatpush.msra.mxu0 %v221
  %229 = vmatpush.msra.mxu0 %v220
  %230 = vmatpush.msra.mxu0 %v219
  %231 = vmatpush.msra.mxu0 %v218
  %232 = vmatpush.msra.mxu0 %v217
  %233 = vmatpush.msra.mxu0 %v216
  %234 = vmatpush.msra.mxu0 %v215
  %235 = vmatpush.msra.mxu0 %v214
  %236 = vmatpush.msra.mxu0 %v213
  %237 = vmatpush.msra.mxu0 %v212
  %238 = vmatpush.msra.mxu0 %v211
  %239 = vmatpush.msra.mxu0 %v210
  %240 = vmatpush.msra.mxu0 %v209
  %241 = vmatpush.msra.mxu0 %v208
  %242 = vmatpush.msra.mxu0 %v207
  %243 = vmatmul.f32.gmra.mxu0 %v199
  %v244 = vpop.f32.mrf.mxu0
  %v245 = vadd.f32 %v225, %v244
  %246 = vmatmul.f32.gmra.mxu0 %v200
  %v247 = vpop.f32.mrf.mxu0
  %v248 = vadd.f32 %v225, %v247
  %249 = vmatmul.f32.gmra.mxu0 %v201
  %v250 = vpop.f32.mrf.mxu0
  %v251 = vadd.f32 %v225, %v250
  %252 = vmatmul.f32.gmra.mxu0 %v202
  %v253 = vpop.f32.mrf.mxu0
  %v254 = vadd.f32 %v225, %v253
  %255 = vmatmul.f32.gmra.mxu0 %v203
  %v256 = vpop.f32.mrf.mxu0
  %v257 = vadd.f32 %v225, %v256
  %258 = vmatmul.f32.gmra.mxu0 %v204
  %v259 = vpop.f32.mrf.mxu0
  %v260 = vadd.f32 %v225, %v259
  %261 = vmatmul.f32.gmra.mxu0 %v205
  %v262 = vpop.f32.mrf.mxu0
  %v263 = vadd.f32 %v225, %v262
  %264 = vmatmul.f32.gmra.mxu0 %v206
  %v265 = vpop.f32.mrf.mxu0
  %v266 = vadd.f32 %v225, %v265
  %267 = vdwg.mxu0
  %vm268 = vcmask 15360
  %269 = vst.msk [vmem:[%s7] sm:$0xff] %vm268, %v245
  %270 = vst.msk [vmem:[%s7 + $0x8] sm:$0xff] %vm268, %v248
  %271 = vst.msk [vmem:[%s7 + $0x10] sm:$0xff] %vm268, %v251
  %272 = vst.msk [vmem:[%s7 + $0x18] sm:$0xff] %vm268, %v254
  %273 = vst.msk [vmem:[%s7 + $0x20] sm:$0xff] %vm268, %v257
  %274 = vst.msk [vmem:[%s7 + $0x28] sm:$0xff] %vm268, %v260
  %275 = vst.msk [vmem:[%s7 + $0x30] sm:$0xff] %vm268, %v263
  %276 = vst.msk [vmem:[%s7 + $0x38] sm:$0xff] %vm268, %v266
  // Predicated region
  $region30: #{qnetwork_forward.1} parent=0 // pred_check
    _
  $region31: #{qnetwork_forward.1} parent=0 // pred_check_branch
    %278 = sbr.rel (0) target = $region33
  $region32: #{qnetwork_forward.1} parent=0 // pred_region
    _
  $region33: #{qnetwork_forward.1} parent=0 // pred_fallthru
    _
  // Predicated region
  $region34: #{qnetwork_forward.1} parent=0 // pred_check
    _
  $region35: #{qnetwork_forward.1} parent=0 // pred_check_branch
    %280 = sbr.rel (0) target = $region37
  $region36: #{qnetwork_forward.1} parent=0 // pred_region
    _
  $region37: #{qnetwork_forward.1} parent=0 // pred_fallthru
    _

</llo_original>
